<compile_context>
chip_gen: v7x
topology: tpu7x:2x2x1
jax: 0.10.0
libtpu: 0.0.40
codegen_flags: <defaults>
</compile_context>

<pallas_src>
import functools

import jax
import jax.numpy as jnp
from jax.experimental import pallas as pl
from jax.experimental.pallas import tpu as pltpu


_MASK = -1e30                      # "minus infinity" that never overflows/NaNs.
_VMEM_BUDGET = 36 * 1024 * 1024    # working-set target (headroom under limit)
_VMEM_LIMIT = 40 * 1024 * 1024     # <= ~40 MiB so v7x (64 MiB physical) is safe


def _round_up(x, m):
    return (x + m - 1) // m * m


# ---------------------------------------------------------------------------
# Pre-pass: row-wise L2 normalization (optionally scaled by 1/tau), bf16 out,
# with the per-column sums of the normalized rows fused in (for mean(sim)).
# ---------------------------------------------------------------------------
def _normalize_kernel(x_ref, o_ref, colsum_ref, *, scale):
    i = pl.program_id(0)
    x = x_ref[...].astype(jnp.float32)
    sumsq = jnp.sum(x * x, axis=-1, keepdims=True)
    # x / max(||x||, 1e-12)  ==  x * rsqrt(max(||x||^2, 1e-24))
    inv = jax.lax.rsqrt(jnp.maximum(sumsq, 1e-24)) * scale
    y = (x * inv).astype(o_ref.dtype)
    o_ref[...] = y

    # Fused column sums (accumulated across the grid) -> wrapper computes
    # mean(sim) without an extra O(N*D) HBM read of the normalized matrix.
    @pl.when(i == 0)
    def _():
        colsum_ref[...] = jnp.zeros(colsum_ref.shape, colsum_ref.dtype)
    colsum_ref[...] += jnp.sum(y.astype(jnp.float32), axis=0, keepdims=True)


def _prepass_rows(block, d_pad, budget=_VMEM_BUDGET):
    """Pre-pass row tile: a divisor of `block`, multiple of 8, VMEM-safe."""
    r = block
    while r > 8 and r % 16 == 0 and (r > 256 or 16 * r * d_pad > budget):
        r //= 2
    return r


def _normalize_scaled(x, n_pad, d_pad, block, scale, out_dtype):
    n, d = x.shape
    # TODO(synk): the jnp.pad HBM round-trip could be folded into this pre-pass
    # (handle the ragged tail in-kernel); minor win, skipped for robustness.
    x_pad = jnp.pad(x, ((0, n_pad - n), (0, d_pad - d)))
    rows = _prepass_rows(block, d_pad)
    return pl.pallas_call(
        functools.partial(_normalize_kernel, scale=float(scale)),
        out_shape=(jax.ShapeDtypeStruct((n_pad, d_pad), out_dtype),
                   jax.ShapeDtypeStruct((1, d_pad), jnp.float32)),
        grid=(n_pad // rows,),
        in_specs=[pl.BlockSpec((rows, d_pad), lambda i: (i, 0))],
        out_specs=(pl.BlockSpec((rows, d_pad), lambda i: (i, 0)),
                   pl.BlockSpec((1, d_pad), lambda i: (0, 0))),
        compiler_params=pltpu.CompilerParams(
            dimension_semantics=("arbitrary",),   # colsum accumulates over i
            vmem_limit_bytes=_VMEM_LIMIT),
    )(x_pad)


# ---------------------------------------------------------------------------
# Main kernel: tiled similarity, fixed-max exp, row/column sum-exp partials.
# ---------------------------------------------------------------------------
def _ntxent_tiles_kernel(a_ref, t_ref, cshift_ref, rshift_ref,
                         row_se_ref, col_se_ref, *, tn, use_row_shift):
    j = pl.program_id(1)

    # (tm, tn) f32 similarity tile; 1/tau is already folded into `a`.
    # dot_general contracts on the shared embedding axis -> no explicit .T.
    s = jax.lax.dot_general(
        a_ref[...], t_ref[...],
        dimension_numbers=(((1,), (1,)), ((), ())),
        preferred_element_type=jnp.float32)

    # Fixed max = 1/tau (logits are bounded, see wrapper check): no per-tile
    # max reduce, no online-max rescale.  The column shift already carries the
    # -1/tau offset *and* the column-padding mask, so that add replaces the
    # plain "- max" subtract at zero extra cost.  The row shift is only
    # emitted when row padding exists (static flag).
    z = s + cshift_ref[...]               # (1, tn): -1/tau valid col, -1e30 pad
    if use_row_shift:                     # static Python branch
        z = z + rshift_ref[...]           # (tm, 1): 0 valid row, -1e30 pad
    p = jnp.exp(z)                        # single N^2 exp pass; masked -> 0.0

    # Per-(row-tile, column) partial column sums; combined cheaply in wrapper.
    col_se_ref[...] = jnp.sum(p, axis=0, keepdims=True).reshape(1, 1, tn)

    # Running row sum-exp, accumulated directly in the resident output block.
    @pl.when(j == 0)
    def _():
        row_se_ref[...] = jnp.zeros(row_se_ref.shape, row_se_ref.dtype)
    row_se_ref[...] += jnp.sum(p, axis=1, keepdims=True)


def ntxent_loss(audio_embeds, text_embeds, labels=None, temperature=0.07,
                *, block_rows=1024, block_cols=512):
    """NTXent forward pass. `labels` is ignored (as in the reference)."""
    del labels  # unused by the reference forward
    n, d = audio_embeds.shape
    assert text_embeds.shape == (n, d)
    tau = float(temperature)
    if tau < 0.023:
        # exp(s - 1/tau) spans down to exp(-2/tau); below tau ~ 0.023 an
        # entire row can underflow to 0 (log -> -inf).
        raise ValueError(f"temperature={tau} too small for fixed-max kernel")
    inv_tau = 1.0 / tau

    d_pad = _round_up(d, 128)

    # Tile selection:
    #  * row tile up to 1024 so text re-reads clear the v6e HBM ridge,
    #  * but at least two row tiles so both v7x TensorCores get work,
    #  * wider column tile in the small-D regime to cover DMA/step overhead,
    #  * shrink the row tile if the VMEM working set exceeds ~36 MiB (v7x).
    if d_pad <= 256:
        block_cols = max(block_cols, 1024)
    tm = max(8, min(block_rows, _round_up((n + 1) // 2, 8)))
    tn = min(block_cols, _round_up(n, 128))
    while tm > 128 and 4 * d_pad * (tm + tn) + 12 * tm * tn > _VMEM_BUDGET:
        tm = max(128, _round_up(tm // 2, 8))

    n_pad_a = _round_up(n, tm)
    n_pad_t = _round_up(n, tn)
    num_i = n_pad_a // tm
    num_j = n_pad_t // tn

    # O(N*D) pre-pass: normalize once, fold 1/tau into audio, bf16 for the MXU.
    a_n, a_sum = _normalize_scaled(audio_embeds, n_pad_a, d_pad, tm, inv_tau,
                                   jnp.bfloat16)
    t_n, t_sum = _normalize_scaled(text_embeds, n_pad_t, d_pad, tn, 1.0,
                                   jnp.bfloat16)

    # Column shift = -1/tau (fixed max) + column-padding mask.
    col_ids = jnp.arange(n_pad_t, dtype=jnp.int32)
    col_shift = jnp.where(col_ids < n, -inv_tau, _MASK).astype(
        jnp.float32).reshape(1, n_pad_t)
    # Row shift masks padded rows out of the column sums (only used if needed).
    row_ids = jnp.arange(n_pad_a, dtype=jnp.int32)
    row_shift = jnp.where(row_ids < n, 0.0, _MASK).astype(
        jnp.float32).reshape(n_pad_a, 1)
    use_row_shift = (n_pad_a != n)

    kernel = functools.partial(_ntxent_tiles_kernel, tn=tn,
                               use_row_shift=use_row_shift)

    cost = pl.CostEstimate(
        flops=2 * n_pad_a * n_pad_t * d_pad,
        transcendentals=n_pad_a * n_pad_t,
        bytes_accessed=2 * (n_pad_a + num_i * n_pad_t) * d_pad
        + 4 * (n_pad_a + 2 * num_i * n_pad_t + num_i * num_j * tm))

    row_se, col_se = pl.pallas_call(
        kernel,
        out_shape=(
            jax.ShapeDtypeStruct((n_pad_a, 1), jnp.float32),
            jax.ShapeDtypeStruct((num_i, 1, n_pad_t), jnp.float32),
        ),
        grid=(num_i, num_j),
        in_specs=[
            # audio tile: constant over j -> stays resident per row tile
            pl.BlockSpec((tm, d_pad), lambda i, j: (i, 0)),
            # text tile: streamed (double-buffered) over the inner axis
            pl.BlockSpec((tn, d_pad), lambda i, j: (j, 0)),
            # column shift (-1/tau + column mask), lane-dense
            pl.BlockSpec((1, tn), lambda i, j: (0, j)),
            # row mask (only read when row padding exists)
            pl.BlockSpec((tm, 1), lambda i, j: (i, 0)),
        ],
        out_specs=(
            # (tm, 1) is written once per row tile -> masked-store cost of the
            # lane-width-1 layout is negligible here.
            pl.BlockSpec((tm, 1), lambda i, j: (i, 0)),
            pl.BlockSpec((1, 1, tn), lambda i, j: (i, 0, j)),
        ),
        compiler_params=pltpu.CompilerParams(
            dimension_semantics=("parallel", "arbitrary"),
            vmem_limit_bytes=_VMEM_LIMIT),
        cost_estimate=cost,
    )(a_n, t_n, col_shift, row_shift)

    # --- tiny O(N + N*N/TM) combines, done by XLA on lane-dense data --------
    m = inv_tau
    lse_row = m + jnp.log(row_se[:n, 0])                        # (n,)
    lse_col = m + jnp.log(jnp.sum(col_se[:, 0, :n], axis=0))    # (n,)

    # mean(sim) from the fused pre-pass column sums: a single length-D dot.
    mean_sim = jnp.dot(a_sum[0], t_sum[0]) / (n * n)

    return 0.5 * (jnp.mean(lse_row) + jnp.mean(lse_col)) - mean_sim


# ---------------------------------------------------------------------------
# Pure-JAX references for sanity checking.
# ---------------------------------------------------------------------------
def _ntxent_ref(audio, text, temperature, quantize_bf16=False):
    a = audio / jnp.maximum(
        jnp.linalg.norm(audio, axis=-1, keepdims=True), 1e-12)
    t = text / jnp.maximum(
        jnp.linalg.norm(text, axis=-1, keepdims=True), 1e-12)
    if quantize_bf16:
        # Mimic the kernel's bf16 operand quantization (1/tau folded into a).
        a = (a * (1.0 / temperature)).astype(jnp.bfloat16).astype(jnp.float32)
        t = t.astype(jnp.bfloat16).astype(jnp.float32)
        sim = a @ t.T
    else:
        sim = (a @ t.T) / temperature
    a2t = -jnp.mean(jax.nn.log_softmax(sim, axis=1))
    t2a = -jnp.mean(jax.nn.log_softmax(sim.T, axis=1))
    return 0.5 * a2t + 0.5 * t2a


if __name__ == "__main__":
    key = jax.random.PRNGKey(0)
    k_a, k_t = jax.random.split(key)

    N, D = 8, 32  # small batch of paired audio/text embeddings
    audio = jax.random.normal(k_a, (N, D), dtype=jnp.float32)
    text = jax.random.normal(k_t, (N, D), dtype=jnp.float32)
    labels = jnp.arange(N, dtype=jnp.int32)  # unused by the forward pass

    loss_fn = jax.jit(ntxent_loss, static_argnames=("temperature",))
    loss = loss_fn(audio, text, labels, temperature=0.07)
    jax.block_until_ready(loss)

    ref_bf16 = _ntxent_ref(audio, text, 0.07, quantize_bf16=True)
    ref_f32 = _ntxent_ref(audio, text, 0.07)

    # Tight check against a reference with the same bf16 operand quantization,
    # plus a looser check against the pure-f32 reference semantics.
    assert jnp.allclose(loss, ref_bf16, rtol=2e-3, atol=2e-3), (loss, ref_bf16)
    assert jnp.allclose(loss, ref_f32, rtol=3e-2, atol=1e-1), (loss, ref_f32)

    print("KERNEL_OK")
</pallas_src>

<mosaic_0001>
module attributes {stable_mosaic.version = 11 : i64} {
  func.func @_normalize_kernel(%arg0: i32, %arg1: memref<8x128xf32, #tpu.memory_space<vmem>>, %arg2: memref<8x128xbf16, #tpu.memory_space<vmem>>, %arg3: memref<1x128xf32, #tpu.memory_space<vmem>>) attributes {dimension_semantics = [#tpu.dimension_semantics<arbitrary>], iteration_bounds = array<i64: 1>, scalar_prefetch = 0 : i64, scratch_operands = 0 : i64, tpu.core_type = #tpu.core_type<tc>, window_params = [{transform_indices = @transform_0, window_bounds = array<i64: 8, 128>}, {transform_indices = @transform_1, window_bounds = array<i64: 8, 128>}, {pipeline_mode = #tpu.pipeline_mode<synchronous>, transform_indices = @transform_2, window_bounds = array<i64: 1, 128>}]} {
    %c0 = arith.constant 0 : index
    %c0_0 = arith.constant 0 : index
    %0 = vector.load %arg1[%c0, %c0_0] : memref<8x128xf32, #tpu.memory_space<vmem>>, vector<8x128xf32>
    %1 = arith.mulf %0, %0 : vector<8x128xf32>
    %cst = arith.constant dense<0.000000e+00> : vector<8xf32>
    %2 = vector.multi_reduction <add>, %1, %cst [1] : vector<8x128xf32> to vector<8xf32>
    %3 = vector.shape_cast %2 : vector<8xf32> to vector<8x1xf32>
    %cst_1 = arith.constant 1.000000e-24 : f32
    %4 = vector.broadcast %cst_1 : f32 to vector<8x1xf32>
    %5 = arith.maximumf %3, %4 : vector<8x1xf32>
    %6 = math.rsqrt %5 : vector<8x1xf32>
    %cst_2 = arith.constant 14.2857141 : f32
    %7 = vector.broadcast %cst_2 : f32 to vector<8x1xf32>
    %8 = arith.mulf %6, %7 : vector<8x1xf32>
    %9 = vector.broadcast %8 : vector<8x1xf32> to vector<8x128xf32>
    %10 = arith.mulf %0, %9 : vector<8x128xf32>
    %11 = arith.truncf %10 : vector<8x128xf32> to vector<8x128xbf16>
    %c0_3 = arith.constant 0 : index
    %c0_4 = arith.constant 0 : index
    %12 = vector.load %arg2[%c0_3, %c0_4] : memref<8x128xbf16, #tpu.memory_space<vmem>>, vector<8x128xbf16>
    tpu.vector_store %arg2[%c0_3, %c0_4], %11 {strides = array<i32>} : memref<8x128xbf16, #tpu.memory_space<vmem>>, vector<8x128xbf16>,
    %c0_i32 = arith.constant 0 : i32
    %13 = arith.cmpi eq, %arg0, %c0_i32 : i32
    %14 = arith.extui %13 : i1 to i32
    %c0_i32_5 = arith.constant 0 : i32
    %15 = arith.cmpi ne, %14, %c0_i32_5 : i32
    scf.if %15 {
      %cst_11 = arith.constant 0.000000e+00 : f32
      %22 = vector.broadcast %cst_11 : f32 to vector<1x128xf32>
      %c0_12 = arith.constant 0 : index
      %c0_13 = arith.constant 0 : index
      %23 = vector.load %arg3[%c0_12, %c0_13] : memref<1x128xf32, #tpu.memory_space<vmem>>, vector<1x128xf32>
      tpu.vector_store %arg3[%c0_12, %c0_13], %22 {strides = array<i32>} : memref<1x128xf32, #tpu.memory_space<vmem>>, vector<1x128xf32>,
    } else {
    }
    %c0_6 = arith.constant 0 : index
    %c0_7 = arith.constant 0 : index
    %16 = vector.load %arg3[%c0_6, %c0_7] : memref<1x128xf32, #tpu.memory_space<vmem>>, vector<1x128xf32>
    %17 = arith.extf %11 : vector<8x128xbf16> to vector<8x128xf32>
    %cst_8 = arith.constant dense<0.000000e+00> : vector<128xf32>
    %18 = vector.multi_reduction <add>, %17, %cst_8 [0] : vector<8x128xf32> to vector<128xf32>
    %19 = vector.shape_cast %18 : vector<128xf32> to vector<1x128xf32>
    %20 = arith.addf %16, %19 : vector<1x128xf32>
    %c0_9 = arith.constant 0 : index
    %c0_10 = arith.constant 0 : index
    %21 = vector.load %arg3[%c0_9, %c0_10] : memref<1x128xf32, #tpu.memory_space<vmem>>, vector<1x128xf32>
    tpu.vector_store %arg3[%c0_9, %c0_10], %20 {strides = array<i32>} : memref<1x128xf32, #tpu.memory_space<vmem>>, vector<1x128xf32>,
    return
  }
  func.func @transform_0(%arg0: i32) -> (i32, i32) {
    %c0_i32 = arith.constant 0 : i32
    %c0_i32_0 = arith.constant 0 : i32
    return %arg0, %c0_i32 : i32, i32
  }
  func.func @transform_1(%arg0: i32) -> (i32, i32) {
    %c0_i32 = arith.constant 0 : i32
    %c0_i32_0 = arith.constant 0 : i32
    return %arg0, %c0_i32 : i32, i32
  }
  func.func @transform_2(%arg0: i32) -> (i32, i32) {
    %c0_i32 = arith.constant 0 : i32
    %c0_i32_0 = arith.constant 0 : i32
    %c0_i32_1 = arith.constant 0 : i32
    return %c0_i32, %c0_i32_0 : i32, i32
  }
}

module attributes {stable_mosaic.version = 11 : i64} {
  func.func @_normalize_kernel(%arg0: i32, %arg1: memref<128x128xf32, #tpu.memory_space<vmem>>, %arg2: memref<128x128xbf16, #tpu.memory_space<vmem>>, %arg3: memref<1x128xf32, #tpu.memory_space<vmem>>) attributes {dimension_semantics = [#tpu.dimension_semantics<arbitrary>], iteration_bounds = array<i64: 1>, scalar_prefetch = 0 : i64, scratch_operands = 0 : i64, tpu.core_type = #tpu.core_type<tc>, window_params = [{transform_indices = @transform_0, window_bounds = array<i64: 128, 128>}, {transform_indices = @transform_1, window_bounds = array<i64: 128, 128>}, {pipeline_mode = #tpu.pipeline_mode<synchronous>, transform_indices = @transform_2, window_bounds = array<i64: 1, 128>}]} {
    %c0 = arith.constant 0 : index
    %c0_0 = arith.constant 0 : index
    %0 = vector.load %arg1[%c0, %c0_0] : memref<128x128xf32, #tpu.memory_space<vmem>>, vector<128x128xf32>
    %1 = arith.mulf %0, %0 : vector<128x128xf32>
    %cst = arith.constant dense<0.000000e+00> : vector<128xf32>
    %2 = vector.multi_reduction <add>, %1, %cst [1] : vector<128x128xf32> to vector<128xf32>
    %3 = vector.shape_cast %2 : vector<128xf32> to vector<128x1xf32>
    %cst_1 = arith.constant 1.000000e-24 : f32
    %4 = vector.broadcast %cst_1 : f32 to vector<128x1xf32>
    %5 = arith.maximumf %3, %4 : vector<128x1xf32>
    %6 = math.rsqrt %5 : vector<128x1xf32>
    %cst_2 = arith.constant 1.000000e+00 : f32
    %7 = vector.broadcast %cst_2 : f32 to vector<128x1xf32>
    %8 = arith.mulf %6, %7 : vector<128x1xf32>
    %9 = vector.broadcast %8 : vector<128x1xf32> to vector<128x128xf32>
    %10 = arith.mulf %0, %9 : vector<128x128xf32>
    %11 = arith.truncf %10 : vector<128x128xf32> to vector<128x128xbf16>
    %c0_3 = arith.constant 0 : index
    %c0_4 = arith.constant 0 : index
    %12 = vector.load %arg2[%c0_3, %c0_4] : memref<128x128xbf16, #tpu.memory_space<vmem>>, vector<128x128xbf16>
    tpu.vector_store %arg2[%c0_3, %c0_4], %11 {strides = array<i32>} : memref<128x128xbf16, #tpu.memory_space<vmem>>, vector<128x128xbf16>,
    %c0_i32 = arith.constant 0 : i32
    %13 = arith.cmpi eq, %arg0, %c0_i32 : i32
    %14 = arith.extui %13 : i1 to i32
    %c0_i32_5 = arith.constant 0 : i32
    %15 = arith.cmpi ne, %14, %c0_i32_5 : i32
    scf.if %15 {
      %cst_11 = arith.constant 0.000000e+00 : f32
      %22 = vector.broadcast %cst_11 : f32 to vector<1x128xf32>
      %c0_12 = arith.constant 0 : index
      %c0_13 = arith.constant 0 : index
      %23 = vector.load %arg3[%c0_12, %c0_13] : memref<1x128xf32, #tpu.memory_space<vmem>>, vector<1x128xf32>
      tpu.vector_store %arg3[%c0_12, %c0_13], %22 {strides = array<i32>} : memref<1x128xf32, #tpu.memory_space<vmem>>, vector<1x128xf32>,
    } else {
    }
    %c0_6 = arith.constant 0 : index
    %c0_7 = arith.constant 0 : index
    %16 = vector.load %arg3[%c0_6, %c0_7] : memref<1x128xf32, #tpu.memory_space<vmem>>, vector<1x128xf32>
    %17 = arith.extf %11 : vector<128x128xbf16> to vector<128x128xf32>
    %cst_8 = arith.constant dense<0.000000e+00> : vector<128xf32>
    %18 = vector.multi_reduction <add>, %17, %cst_8 [0] : vector<128x128xf32> to vector<128xf32>
    %19 = vector.shape_cast %18 : vector<128xf32> to vector<1x128xf32>
    %20 = arith.addf %16, %19 : vector<1x128xf32>
    %c0_9 = arith.constant 0 : index
    %c0_10 = arith.constant 0 : index
    %21 = vector.load %arg3[%c0_9, %c0_10] : memref<1x128xf32, #tpu.memory_space<vmem>>, vector<1x128xf32>
    tpu.vector_store %arg3[%c0_9, %c0_10], %20 {strides = array<i32>} : memref<1x128xf32, #tpu.memory_space<vmem>>, vector<1x128xf32>,
    return
  }
  func.func @transform_0(%arg0: i32) -> (i32, i32) {
    %c0_i32 = arith.constant 0 : i32
    %c0_i32_0 = arith.constant 0 : i32
    return %arg0, %c0_i32 : i32, i32
  }
  func.func @transform_1(%arg0: i32) -> (i32, i32) {
    %c0_i32 = arith.constant 0 : i32
    %c0_i32_0 = arith.constant 0 : i32
    return %arg0, %c0_i32 : i32, i32
  }
  func.func @transform_2(%arg0: i32) -> (i32, i32) {
    %c0_i32 = arith.constant 0 : i32
    %c0_i32_0 = arith.constant 0 : i32
    %c0_i32_1 = arith.constant 0 : i32
    return %c0_i32, %c0_i32_0 : i32, i32
  }
}

module attributes {stable_mosaic.version = 11 : i64} {
  func.func @_ntxent_tiles_kernel(%arg0: i32, %arg1: i32, %arg2: memref<8x128xbf16, #tpu.memory_space<vmem>>, %arg3: memref<128x128xbf16, #tpu.memory_space<vmem>>, %arg4: memref<1x128xf32, #tpu.memory_space<vmem>>, %arg5: memref<8x1xf32, #tpu.memory_space<vmem>>, %arg6: memref<8x1xf32, #tpu.memory_space<vmem>>, %arg7: memref<1x1x128xf32, #tpu.memory_space<vmem>>) attributes {dimension_semantics = [#tpu.dimension_semantics<parallel>, #tpu.dimension_semantics<arbitrary>], iteration_bounds = array<i64: 1, 1>, scalar_prefetch = 0 : i64, scratch_operands = 0 : i64, tpu.core_type = #tpu.core_type<tc>, window_params = [{transform_indices = @transform_0, window_bounds = array<i64: 8, 128>}, {transform_indices = @transform_1, window_bounds = array<i64: 128, 128>}, {transform_indices = @transform_2, window_bounds = array<i64: 1, 128>}, {transform_indices = @transform_3, window_bounds = array<i64: 8, 1>}, {transform_indices = @transform_4, window_bounds = array<i64: 8, 1>}, {transform_indices = @transform_5, window_bounds = array<i64: 1, 1, 128>}]} {
    %c0 = arith.constant 0 : index
    %c0_0 = arith.constant 0 : index
    %0 = vector.load %arg2[%c0, %c0_0] : memref<8x128xbf16, #tpu.memory_space<vmem>>, vector<8x128xbf16>
    %c0_1 = arith.constant 0 : index
    %c0_2 = arith.constant 0 : index
    %1 = vector.load %arg3[%c0_1, %c0_2] : memref<128x128xbf16, #tpu.memory_space<vmem>>, vector<128x128xbf16>
    %cst = arith.constant dense<0.000000e+00> : vector<8x128xf32>
    %2 = tpu.matmul %0, %1, %cst {dimension_numbers = #tpu.dot_dimension_numbers<[1], [1], [0], [0], [0, 0, 1, 0], [], []>} : vector<8x128xbf16>, vector<128x128xbf16>, vector<8x128xf32> -> vector<8x128xf32>
    %c0_3 = arith.constant 0 : index
    %c0_4 = arith.constant 0 : index
    %3 = vector.load %arg4[%c0_3, %c0_4] : memref<1x128xf32, #tpu.memory_space<vmem>>, vector<1x128xf32>
    %4 = vector.broadcast %3 : vector<1x128xf32> to vector<8x128xf32>
    %5 = arith.addf %2, %4 : vector<8x128xf32>
    %6 = math.exp %5 : vector<8x128xf32>
    %cst_5 = arith.constant dense<0.000000e+00> : vector<128xf32>
    %7 = vector.multi_reduction <add>, %6, %cst_5 [0] : vector<8x128xf32> to vector<128xf32>
    %8 = vector.shape_cast %7 : vector<128xf32> to vector<1x128xf32>
    %9 = vector.shape_cast %8 : vector<1x128xf32> to vector<1x1x128xf32>
    %c0_6 = arith.constant 0 : index
    %c0_7 = arith.constant 0 : index
    %c0_8 = arith.constant 0 : index
    %10 = vector.load %arg7[%c0_6, %c0_7, %c0_8] : memref<1x1x128xf32, #tpu.memory_space<vmem>>, vector<1x1x128xf32>
    tpu.vector_store %arg7[%c0_6, %c0_7, %c0_8], %9 {strides = array<i32>} : memref<1x1x128xf32, #tpu.memory_space<vmem>>, vector<1x1x128xf32>,
    %c0_i32 = arith.constant 0 : i32
    %11 = arith.cmpi eq, %arg1, %c0_i32 : i32
    %12 = arith.extui %11 : i1 to i32
    %c0_i32_9 = arith.constant 0 : i32
    %13 = arith.cmpi ne, %12, %c0_i32_9 : i32
    scf.if %13 {
      %cst_15 = arith.constant 0.000000e+00 : f32
      %19 = vector.broadcast %cst_15 : f32 to vector<8x1xf32>
      %c0_16 = arith.constant 0 : index
      %c0_17 = arith.constant 0 : index
      %20 = vector.load %arg6[%c0_16, %c0_17] : memref<8x1xf32, #tpu.memory_space<vmem>>, vector<8x1xf32>
      tpu.vector_store %arg6[%c0_16, %c0_17], %19 {strides = array<i32>} : memref<8x1xf32, #tpu.memory_space<vmem>>, vector<8x1xf32>,
    } else {
    }
    %c0_10 = arith.constant 0 : index
    %c0_11 = arith.constant 0 : index
    %14 = vector.load %arg6[%c0_10, %c0_11] : memref<8x1xf32, #tpu.memory_space<vmem>>, vector<8x1xf32>
    %cst_12 = arith.constant dense<0.000000e+00> : vector<8xf32>
    %15 = vector.multi_reduction <add>, %6, %cst_12 [1] : vector<8x128xf32> to vector<8xf32>
    %16 = vector.shape_cast %15 : vector<8xf32> to vector<8x1xf32>
    %17 = arith.addf %14, %16 : vector<8x1xf32>
    %c0_13 = arith.constant 0 : index
    %c0_14 = arith.constant 0 : index
    %18 = vector.load %arg6[%c0_13, %c0_14] : memref<8x1xf32, #tpu.memory_space<vmem>>, vector<8x1xf32>
    tpu.vector_store %arg6[%c0_13, %c0_14], %17 {strides = array<i32>} : memref<8x1xf32, #tpu.memory_space<vmem>>, vector<8x1xf32>,
    return
  }
  func.func @transform_0(%arg0: i32, %arg1: i32) -> (i32, i32) {
    %c0_i32 = arith.constant 0 : i32
    %c0_i32_0 = arith.constant 0 : i32
    return %arg0, %c0_i32 : i32, i32
  }
  func.func @transform_1(%arg0: i32, %arg1: i32) -> (i32, i32) {
    %c0_i32 = arith.constant 0 : i32
    %c0_i32_0 = arith.constant 0 : i32
    return %arg1, %c0_i32 : i32, i32
  }
  func.func @transform_2(%arg0: i32, %arg1: i32) -> (i32, i32) {
    %c0_i32 = arith.constant 0 : i32
    %c0_i32_0 = arith.constant 0 : i32
    return %c0_i32, %arg1 : i32, i32
  }
  func.func @transform_3(%arg0: i32, %arg1: i32) -> (i32, i32) {
    %c0_i32 = arith.constant 0 : i32
    %c0_i32_0 = arith.constant 0 : i32
    return %arg0, %c0_i32 : i32, i32
  }
  func.func @transform_4(%arg0: i32, %arg1: i32) -> (i32, i32) {
    %c0_i32 = arith.constant 0 : i32
    %c0_i32_0 = arith.constant 0 : i32
    return %arg0, %c0_i32 : i32, i32
  }
  func.func @transform_5(%arg0: i32, %arg1: i32) -> (i32, i32, i32) {
    %c0_i32 = arith.constant 0 : i32
    %c0_i32_0 = arith.constant 0 : i32
    return %arg0, %c0_i32, %arg1 : i32, i32, i32
  }
}

</mosaic_0001>

<llo_original>
// kernel: ntxent_loss.3
$region0: #{ntxent_loss.3}
  #allocation0 [shape = 'u32[]', space=smem, size = 0x4, offset = 0x4, fixed_abs, tag = 'smem constant byte address 0x4 - core index']
  #allocation1 [shape = 'u32[144,128]{1,0:T(1,128)}', space=vmem, size = 0x12000, scoped, tag = 'internal scratch']
  %s0 = inlined_call_operand.vmem [shape: f32[8,128], index: 0, kind: input, shape index: {}]
  %s1 = inlined_call_operand.vmem [shape: bf16[8,128], index: 1, kind: output, shape index: {0}]
  %s2 = inlined_call_operand.vmem [shape: f32[1,128], index: 2, kind: output, shape index: {1}]
  %3 = xla_tuple %s1, %s2
  %s4 = sld [smem:[#allocation0]]
  $region26: #{ntxent_loss.3} parent=0
    _
  %s6 = ssub.s32 1, %s4
  %s7 = scalar_select 0, %s6, %s4
  // Predicated region
  $region2: #{ntxent_loss.3} parent=0 // pred_check
    _
  $region3: #{ntxent_loss.3} parent=0 // pred_check_branch
    %9 = sbr.rel (0) target = $region5
  $region4: #{ntxent_loss.3} parent=0 // pred_region
    _
  $region5: #{ntxent_loss.3} parent=0 // pred_fallthru
    _
  %v10 = vld [vmem:[%s0] sm:$0xff]
  %v11 = vmul.f32 %v10, %v10
  %12 = vadd.xlane.f32.xlu0 %v11
  %v13 = vpop.xlane.xlu0 %12
  %v14 = vmax.f32 %v13, 1e-24
  %v15 = vrsqrt.pop %v14
  %v16 = vmul.f32 %v15, 14.285714
  %v17 = vmul.f32 %v10, %v16
  %v18 = vpack.c.bf16 %v17, %v17
  %19 = vst [vmem:[%s1] sm:$0xf] %v18
  %p20 = scmp.eq.s32.totalorder 0, 0
  // Predicated region
  $region6: #{ntxent_loss.3} parent=0 // pred_check
    %p21 = pneg %p20
  $region7: #{ntxent_loss.3} parent=0 // pred_check_branch
    %23 = sbr.rel (%p21) target = $region9
  $region8: #{ntxent_loss.3} parent=0 // pred_region
    %24 = vst [vmem:[%s2] sm:$0x1] 0.0
  $region9: #{ntxent_loss.3} parent=0 // pred_fallthru
    _
  %v25 = vld [vmem:[%s2] sm:$0x1]
  %v26 = vunpack.c.l.bf16 %v18
  %v27 = vrot.slane %v26, 4
  %v28 = vadd.f32 %v26, %v27
  %v29 = vrot.slane %v28, 2
  %v30 = vadd.f32 %v28, %v29
  %v31 = vrot.slane %v30, 1
  %v32 = vadd.f32 %v30, %v31
  %v33 = vadd.f32 %v25, %v32
  %34 = vst [vmem:[%s2] sm:$0x1] %v33
  // Predicated region
  $region10: #{ntxent_loss.3} parent=0 // pred_check
    _
  $region11: #{ntxent_loss.3} parent=0 // pred_check_branch
    %36 = sbr.rel (0) target = $region13
  $region12: #{ntxent_loss.3} parent=0 // pred_region
    _
  $region13: #{ntxent_loss.3} parent=0 // pred_fallthru
    _
  // Predicated region
  $region14: #{ntxent_loss.3} parent=0 // pred_check
    _
  $region15: #{ntxent_loss.3} parent=0 // pred_check_branch
    %38 = sbr.rel (0) target = $region17
  $region16: #{ntxent_loss.3} parent=0 // pred_region
    _
  $region17: #{ntxent_loss.3} parent=0 // pred_fallthru
    _
  // Predicated region
  $region18: #{ntxent_loss.3} parent=0 // pred_check
    _
  $region19: #{ntxent_loss.3} parent=0 // pred_check_branch
    %40 = sbr.rel (0) target = $region21
  $region20: #{ntxent_loss.3} parent=0 // pred_region
    _
  $region21: #{ntxent_loss.3} parent=0 // pred_fallthru
    _
  // Predicated region
  $region22: #{ntxent_loss.3} parent=0 // pred_check
    _
  $region23: #{ntxent_loss.3} parent=0 // pred_check_branch
    %42 = sbr.rel (0) target = $region25
  $region24: #{ntxent_loss.3} parent=0 // pred_region
    _
  $region25: #{ntxent_loss.3} parent=0 // pred_fallthru
    _

// kernel: ntxent_loss.4
$region0: #{ntxent_loss.4}
  #allocation0 [shape = 'u32[]', space=smem, size = 0x4, offset = 0x4, fixed_abs, tag = 'smem constant byte address 0x4 - core index']
  #allocation1 [shape = 'u32[144,128]{1,0:T(1,128)}', space=vmem, size = 0x12000, scoped, tag = 'internal scratch']
  %s0 = inlined_call_operand.vmem [shape: f32[128,128], index: 0, kind: input, shape index: {}]
  %s1 = inlined_call_operand.vmem [shape: bf16[128,128], index: 1, kind: output, shape index: {0}]
  %s2 = inlined_call_operand.vmem [shape: f32[1,128], index: 2, kind: output, shape index: {1}]
  %3 = xla_tuple %s1, %s2
  %s4 = sld [smem:[#allocation0]]
  $region26: #{ntxent_loss.4} parent=0
    _
  %s6 = ssub.s32 1, %s4
  %s7 = scalar_select 0, %s6, %s4
  // Predicated region
  $region2: #{ntxent_loss.4} parent=0 // pred_check
    _
  $region3: #{ntxent_loss.4} parent=0 // pred_check_branch
    %9 = sbr.rel (0) target = $region5
  $region4: #{ntxent_loss.4} parent=0 // pred_region
    _
  $region5: #{ntxent_loss.4} parent=0 // pred_fallthru
    _
  %v10 = vld [vmem:[%s0] sm:$0xff]
  %v11 = vld [vmem:[%s0 + $0x8] sm:$0xff]
  %v12 = vld [vmem:[%s0 + $0x10] sm:$0xff]
  %v13 = vld [vmem:[%s0 + $0x18] sm:$0xff]
  %v14 = vld [vmem:[%s0 + $0x20] sm:$0xff]
  %v15 = vld [vmem:[%s0 + $0x28] sm:$0xff]
  %v16 = vld [vmem:[%s0 + $0x30] sm:$0xff]
  %v17 = vld [vmem:[%s0 + $0x38] sm:$0xff]
  %v18 = vld [vmem:[%s0 + $0x40] sm:$0xff]
  %v19 = vld [vmem:[%s0 + $0x48] sm:$0xff]
  %v20 = vld [vmem:[%s0 + $0x50] sm:$0xff]
  %v21 = vld [vmem:[%s0 + $0x58] sm:$0xff]
  %v22 = vld [vmem:[%s0 + $0x60] sm:$0xff]
  %v23 = vld [vmem:[%s0 + $0x68] sm:$0xff]
  %v24 = vld [vmem:[%s0 + $0x70] sm:$0xff]
  %v25 = vld [vmem:[%s0 + $0x78] sm:$0xff]
  %v26 = vmul.f32 %v10, %v10
  %v27 = vmul.f32 %v11, %v11
  %v28 = vmul.f32 %v12, %v12
  %v29 = vmul.f32 %v13, %v13
  %v30 = vmul.f32 %v14, %v14
  %v31 = vmul.f32 %v15, %v15
  %v32 = vmul.f32 %v16, %v16
  %v33 = vmul.f32 %v17, %v17
  %v34 = vmul.f32 %v18, %v18
  %v35 = vmul.f32 %v19, %v19
  %v36 = vmul.f32 %v20, %v20
  %v37 = vmul.f32 %v21, %v21
  %v38 = vmul.f32 %v22, %v22
  %v39 = vmul.f32 %v23, %v23
  %v40 = vmul.f32 %v24, %v24
  %v41 = vmul.f32 %v25, %v25
  %42 = vadd.xlane.f32.xlu0 %v26
  %v43 = vpop.xlane.xlu0 %42
  %44 = vadd.xlane.f32.xlu0 %v27
  %v45 = vpop.xlane.xlu0 %44
  %46 = vadd.xlane.f32.xlu0 %v28
  %v47 = vpop.xlane.xlu0 %46
  %48 = vadd.xlane.f32.xlu0 %v29
  %v49 = vpop.xlane.xlu0 %48
  %50 = vadd.xlane.f32.xlu0 %v30
  %v51 = vpop.xlane.xlu0 %50
  %52 = vadd.xlane.f32.xlu0 %v31
  %v53 = vpop.xlane.xlu0 %52
  %54 = vadd.xlane.f32.xlu0 %v32
  %v55 = vpop.xlane.xlu0 %54
  %56 = vadd.xlane.f32.xlu0 %v33
  %v57 = vpop.xlane.xlu0 %56
  %58 = vadd.xlane.f32.xlu0 %v34
  %v59 = vpop.xlane.xlu0 %58
  %60 = vadd.xlane.f32.xlu0 %v35
  %v61 = vpop.xlane.xlu0 %60
  %62 = vadd.xlane.f32.xlu0 %v36
  %v63 = vpop.xlane.xlu0 %62
  %64 = vadd.xlane.f32.xlu0 %v37
  %v65 = vpop.xlane.xlu0 %64
  %66 = vadd.xlane.f32.xlu0 %v38
  %v67 = vpop.xlane.xlu0 %66
  %68 = vadd.xlane.f32.xlu0 %v39
  %v69 = vpop.xlane.xlu0 %68
  %70 = vadd.xlane.f32.xlu0 %v40
  %v71 = vpop.xlane.xlu0 %70
  %72 = vadd.xlane.f32.xlu0 %v41
  %v73 = vpop.xlane.xlu0 %72
  %v74 = vmax.f32 %v43, 1e-24
  %v75 = vmax.f32 %v45, 1e-24
  %v76 = vmax.f32 %v47, 1e-24
  %v77 = vmax.f32 %v49, 1e-24
  %v78 = vmax.f32 %v51, 1e-24
  %v79 = vmax.f32 %v53, 1e-24
  %v80 = vmax.f32 %v55, 1e-24
  %v81 = vmax.f32 %v57, 1e-24
  %v82 = vmax.f32 %v59, 1e-24
  %v83 = vmax.f32 %v61, 1e-24
  %v84 = vmax.f32 %v63, 1e-24
  %v85 = vmax.f32 %v65, 1e-24
  %v86 = vmax.f32 %v67, 1e-24
  %v87 = vmax.f32 %v69, 1e-24
  %v88 = vmax.f32 %v71, 1e-24
  %v89 = vmax.f32 %v73, 1e-24
  %v90 = vrsqrt.pop %v74
  %v91 = vrsqrt.pop %v75
  %v92 = vrsqrt.pop %v76
  %v93 = vrsqrt.pop %v77
  %v94 = vrsqrt.pop %v78
  %v95 = vrsqrt.pop %v79
  %v96 = vrsqrt.pop %v80
  %v97 = vrsqrt.pop %v81
  %v98 = vrsqrt.pop %v82
  %v99 = vrsqrt.pop %v83
  %v100 = vrsqrt.pop %v84
  %v101 = vrsqrt.pop %v85
  %v102 = vrsqrt.pop %v86
  %v103 = vrsqrt.pop %v87
  %v104 = vrsqrt.pop %v88
  %v105 = vrsqrt.pop %v89
  %v106 = vmul.f32 %v10, %v90
  %v107 = vmul.f32 %v11, %v91
  %v108 = vmul.f32 %v12, %v92
  %v109 = vmul.f32 %v13, %v93
  %v110 = vmul.f32 %v14, %v94
  %v111 = vmul.f32 %v15, %v95
  %v112 = vmul.f32 %v16, %v96
  %v113 = vmul.f32 %v17, %v97
  %v114 = vmul.f32 %v18, %v98
  %v115 = vmul.f32 %v19, %v99
  %v116 = vmul.f32 %v20, %v100
  %v117 = vmul.f32 %v21, %v101
  %v118 = vmul.f32 %v22, %v102
  %v119 = vmul.f32 %v23, %v103
  %v120 = vmul.f32 %v24, %v104
  %v121 = vmul.f32 %v25, %v105
  %v122 = vpack.c.bf16 %v107, %v106
  %v123 = vpack.c.bf16 %v109, %v108
  %v124 = vpack.c.bf16 %v111, %v110
  %v125 = vpack.c.bf16 %v113, %v112
  %v126 = vpack.c.bf16 %v115, %v114
  %v127 = vpack.c.bf16 %v117, %v116
  %v128 = vpack.c.bf16 %v119, %v118
  %v129 = vpack.c.bf16 %v121, %v120
  %v138 = vunpack.c.l.b16 %v122
  %v139 = vunpack.c.h.b16 %v122
  %v140 = vunpack.c.l.b16 %v123
  %v141 = vunpack.c.h.b16 %v123
  %v142 = vunpack.c.l.b16 %v124
  %v143 = vunpack.c.h.b16 %v124
  %v144 = vunpack.c.l.b16 %v125
  %v145 = vunpack.c.h.b16 %v125
  %v146 = vunpack.c.l.b16 %v126
  %v147 = vunpack.c.h.b16 %v126
  %v148 = vunpack.c.l.b16 %v127
  %v149 = vunpack.c.h.b16 %v127
  %v150 = vunpack.c.l.b16 %v128
  %v151 = vunpack.c.h.b16 %v128
  %v152 = vunpack.c.l.b16 %v129
  %v153 = vunpack.c.h.b16 %v129
  %v154 = vpack.c.b16 %v138, %v138
  %v155 = vpack.c.b16 %v139, %v139
  %v156 = vpack.c.b16 %v140, %v140
  %v157 = vpack.c.b16 %v141, %v141
  %v158 = vpack.c.b16 %v142, %v142
  %v159 = vpack.c.b16 %v143, %v143
  %v160 = vpack.c.b16 %v144, %v144
  %v161 = vpack.c.b16 %v145, %v145
  %v162 = vpack.c.b16 %v146, %v146
  %v163 = vpack.c.b16 %v147, %v147
  %v164 = vpack.c.b16 %v148, %v148
  %v165 = vpack.c.b16 %v149, %v149
  %v166 = vpack.c.b16 %v150, %v150
  %v167 = vpack.c.b16 %v151, %v151
  %v168 = vpack.c.b16 %v152, %v152
  %v169 = vpack.c.b16 %v153, %v153
  %186 = vst [vmem:[%s1] sm:$0xf] %v154
  %187 = vst [vmem:[%s1 + $0x4] sm:$0xf] %v155
  %188 = vst [vmem:[%s1 + $0x8] sm:$0xf] %v156
  %189 = vst [vmem:[%s1 + $0xc] sm:$0xf] %v157
  %190 = vst [vmem:[%s1 + $0x10] sm:$0xf] %v158
  %191 = vst [vmem:[%s1 + $0x14] sm:$0xf] %v159
  %192 = vst [vmem:[%s1 + $0x18] sm:$0xf] %v160
  %193 = vst [vmem:[%s1 + $0x1c] sm:$0xf] %v161
  %194 = vst [vmem:[%s1 + $0x20] sm:$0xf] %v162
  %195 = vst [vmem:[%s1 + $0x24] sm:$0xf] %v163
  %196 = vst [vmem:[%s1 + $0x28] sm:$0xf] %v164
  %197 = vst [vmem:[%s1 + $0x2c] sm:$0xf] %v165
  %198 = vst [vmem:[%s1 + $0x30] sm:$0xf] %v166
  %199 = vst [vmem:[%s1 + $0x34] sm:$0xf] %v167
  %200 = vst [vmem:[%s1 + $0x38] sm:$0xf] %v168
  %201 = vst [vmem:[%s1 + $0x3c] sm:$0xf] %v169
  %p202 = scmp.eq.s32.totalorder 0, 0
  // Predicated region
  $region6: #{ntxent_loss.4} parent=0 // pred_check
    %p203 = pneg %p202
  $region7: #{ntxent_loss.4} parent=0 // pred_check_branch
    %205 = sbr.rel (%p203) target = $region9
  $region8: #{ntxent_loss.4} parent=0 // pred_region
    %206 = vst [vmem:[%s2] sm:$0x1] 0.0
  $region9: #{ntxent_loss.4} parent=0 // pred_fallthru
    _
  %v207 = vld [vmem:[%s2] sm:$0x1]
  %v208 = vunpack.c.l.bf16 %v122
  %v209 = vunpack.c.h.bf16 %v122
  %v210 = vunpack.c.l.bf16 %v123
  %v211 = vunpack.c.h.bf16 %v123
  %v212 = vunpack.c.l.bf16 %v124
  %v213 = vunpack.c.h.bf16 %v124
  %v214 = vunpack.c.l.bf16 %v125
  %v215 = vunpack.c.h.bf16 %v125
  %v216 = vunpack.c.l.bf16 %v126
  %v217 = vunpack.c.h.bf16 %v126
  %v218 = vunpack.c.l.bf16 %v127
  %v219 = vunpack.c.h.bf16 %v127
  %v220 = vunpack.c.l.bf16 %v128
  %v221 = vunpack.c.h.bf16 %v128
  %v222 = vunpack.c.l.bf16 %v129
  %v223 = vunpack.c.h.bf16 %v129
  %v224 = vadd.f32 %v208, %v209
  %v225 = vadd.f32 %v224, %v210
  %v226 = vadd.f32 %v225, %v211
  %v227 = vadd.f32 %v226, %v212
  %v228 = vadd.f32 %v227, %v213
  %v229 = vadd.f32 %v228, %v214
  %v230 = vadd.f32 %v229, %v215
  %v231 = vadd.f32 %v230, %v216
  %v232 = vadd.f32 %v231, %v217
  %v233 = vadd.f32 %v232, %v218
  %v234 = vadd.f32 %v233, %v219
  %v235 = vadd.f32 %v234, %v220
  %v236 = vadd.f32 %v235, %v221
  %v237 = vadd.f32 %v236, %v222
  %v238 = vadd.f32 %v237, %v223
  %v239 = vrot.slane %v238, 4
  %v240 = vadd.f32 %v238, %v239
  %v241 = vrot.slane %v240, 2
  %v242 = vadd.f32 %v240, %v241
  %v243 = vrot.slane %v242, 1
  %v244 = vadd.f32 %v242, %v243
  %v245 = vadd.f32 %v207, %v244
  %246 = vst [vmem:[%s2] sm:$0x1] %v245
  // Predicated region
  $region10: #{ntxent_loss.4} parent=0 // pred_check
    _
  $region11: #{ntxent_loss.4} parent=0 // pred_check_branch
    %248 = sbr.rel (0) target = $region13
  $region12: #{ntxent_loss.4} parent=0 // pred_region
    _
  $region13: #{ntxent_loss.4} parent=0 // pred_fallthru
    _
  // Predicated region
  $region14: #{ntxent_loss.4} parent=0 // pred_check
    _
  $region15: #{ntxent_loss.4} parent=0 // pred_check_branch
    %250 = sbr.rel (0) target = $region17
  $region16: #{ntxent_loss.4} parent=0 // pred_region
    _
  $region17: #{ntxent_loss.4} parent=0 // pred_fallthru
    _
  // Predicated region
  $region18: #{ntxent_loss.4} parent=0 // pred_check
    _
  $region19: #{ntxent_loss.4} parent=0 // pred_check_branch
    %252 = sbr.rel (0) target = $region21
  $region20: #{ntxent_loss.4} parent=0 // pred_region
    _
  $region21: #{ntxent_loss.4} parent=0 // pred_fallthru
    _
  // Predicated region
  $region22: #{ntxent_loss.4} parent=0 // pred_check
    _
  $region23: #{ntxent_loss.4} parent=0 // pred_check_branch
    %254 = sbr.rel (0) target = $region25
  $region24: #{ntxent_loss.4} parent=0 // pred_region
    _
  $region25: #{ntxent_loss.4} parent=0 // pred_fallthru
    _

// kernel: ntxent_loss.5
$region0: #{ntxent_loss.5}
  #allocation0 [shape = 'u32[]', space=smem, size = 0x4, offset = 0x4, fixed_abs, tag = 'smem constant byte address 0x4 - core index']
  #allocation1 [shape = 'u32[144,128]{1,0:T(1,128)}', space=vmem, size = 0x12000, scoped, tag = 'internal scratch']
  %s0 = inlined_call_operand.vmem [shape: bf16[8,128], index: 0, kind: input, shape index: {}]
  %s1 = inlined_call_operand.vmem [shape: bf16[128,128], index: 1, kind: input, shape index: {}]
  %s2 = inlined_call_operand.vmem [shape: f32[1,128], index: 2, kind: input, shape index: {}]
  %s3 = inlined_call_operand.vmem [shape: f32[8,1], index: 3, kind: input, shape index: {}]
  %s4 = inlined_call_operand.vmem [shape: f32[8,1], index: 4, kind: output, shape index: {0}]
  %s5 = inlined_call_operand.vmem [shape: f32[1,1,128], index: 5, kind: output, shape index: {1}]
  %6 = xla_tuple %s4, %s5
  %s7 = sld [smem:[#allocation0]]
  $region38: #{ntxent_loss.5} parent=0
    _
  %s9 = ssub.s32 1, %s7
  %s10 = scalar_select 0, %s9, %s7
  // Predicated region
  $region2: #{ntxent_loss.5} parent=0 // pred_check
    _
  $region3: #{ntxent_loss.5} parent=0 // pred_check_branch
    %12 = sbr.rel (0) target = $region5
  $region4: #{ntxent_loss.5} parent=0 // pred_region
    _
  $region5: #{ntxent_loss.5} parent=0 // pred_fallthru
    _
  // Predicated region
  $region6: #{ntxent_loss.5} parent=0 // pred_check
    _
  $region7: #{ntxent_loss.5} parent=0 // pred_check_branch
    %14 = sbr.rel (0) target = $region9
  $region8: #{ntxent_loss.5} parent=0 // pred_region
    _
  $region9: #{ntxent_loss.5} parent=0 // pred_fallthru
    _
  // Predicated region
  $region10: #{ntxent_loss.5} parent=0 // pred_check
    _
  $region11: #{ntxent_loss.5} parent=0 // pred_check_branch
    %16 = sbr.rel (0) target = $region13
  $region12: #{ntxent_loss.5} parent=0 // pred_region
    _
  $region13: #{ntxent_loss.5} parent=0 // pred_fallthru
    _
  // Predicated region
  $region14: #{ntxent_loss.5} parent=0 // pred_check
    _
  $region15: #{ntxent_loss.5} parent=0 // pred_check_branch
    %18 = sbr.rel (0) target = $region17
  $region16: #{ntxent_loss.5} parent=0 // pred_region
    _
  $region17: #{ntxent_loss.5} parent=0 // pred_fallthru
    _
  %v20 = vld [vmem:[%s0] sm:$0xf]
  %v21 = vld [vmem:[%s1] sm:$0xf]
  %v22 = vld [vmem:[%s1 + $0x4] sm:$0xf]
  %v23 = vld [vmem:[%s1 + $0x8] sm:$0xf]
  %v24 = vld [vmem:[%s1 + $0xc] sm:$0xf]
  %v25 = vld [vmem:[%s1 + $0x10] sm:$0xf]
  %v26 = vld [vmem:[%s1 + $0x14] sm:$0xf]
  %v27 = vld [vmem:[%s1 + $0x18] sm:$0xf]
  %v28 = vld [vmem:[%s1 + $0x1c] sm:$0xf]
  %v29 = vld [vmem:[%s1 + $0x20] sm:$0xf]
  %v30 = vld [vmem:[%s1 + $0x24] sm:$0xf]
  %v31 = vld [vmem:[%s1 + $0x28] sm:$0xf]
  %v32 = vld [vmem:[%s1 + $0x2c] sm:$0xf]
  %v33 = vld [vmem:[%s1 + $0x30] sm:$0xf]
  %v34 = vld [vmem:[%s1 + $0x34] sm:$0xf]
  %v35 = vld [vmem:[%s1 + $0x38] sm:$0xf]
  %v36 = vld [vmem:[%s1 + $0x3c] sm:$0xf]
  %v37 = vld [vmem:[%s2] sm:$0x1]
  %v39 = vlaneseq
  %v40 = vshrl.u32 %v39, 7
  %v41 = vsub.s32 0, %v40
  %v42 = vrot.slane %v37, %v41
  %v60 = vunpack.c.l.b16 %v21
  %v61 = vunpack.c.l.b16 %v22
  %v62 = vunpack.c.l.b16 %v23
  %v63 = vunpack.c.l.b16 %v24
  %v64 = vunpack.c.l.b16 %v25
  %v65 = vunpack.c.l.b16 %v26
  %v66 = vunpack.c.l.b16 %v27
  %v67 = vunpack.c.l.b16 %v28
  %v68 = vunpack.c.l.b16 %v29
  %v69 = vunpack.c.l.b16 %v30
  %v70 = vunpack.c.l.b16 %v31
  %v71 = vunpack.c.l.b16 %v32
  %v72 = vunpack.c.l.b16 %v33
  %v73 = vunpack.c.l.b16 %v34
  %v74 = vunpack.c.l.b16 %v35
  %v75 = vunpack.c.l.b16 %v36
  %v76 = vpack.c.b16 %v61, %v60
  %v77 = vpack.c.b16 %v63, %v62
  %v78 = vpack.c.b16 %v65, %v64
  %v79 = vpack.c.b16 %v67, %v66
  %v80 = vpack.c.b16 %v69, %v68
  %v81 = vpack.c.b16 %v71, %v70
  %v82 = vpack.c.b16 %v73, %v72
  %v83 = vpack.c.b16 %v75, %v74
  %92 = vmatprep.subr.bf16.mxu0 0
  %93 = vmatpush1.bf16.xpose.msra.mxu0 %v76
  %94 = vmatprep.subr.bf16.mxu0 0
  %95 = vmatpush1.bf16.xpose.msra.mxu0 %v77
  %96 = vmatprep.subr.bf16.mxu0 0
  %97 = vmatpush1.bf16.xpose.msra.mxu0 %v78
  %98 = vmatprep.subr.bf16.mxu0 0
  %99 = vmatpush1.bf16.xpose.msra.mxu0 %v79
  %100 = vmatprep.subr.bf16.mxu0 0
  %101 = vmatpush1.bf16.xpose.msra.mxu0 %v80
  %102 = vmatprep.subr.bf16.mxu0 0
  %103 = vmatpush1.bf16.xpose.msra.mxu0 %v81
  %104 = vmatprep.subr.bf16.mxu0 0
  %105 = vmatpush1.bf16.xpose.msra.mxu0 %v82
  %106 = vmatprep.subr.bf16.mxu0 0
  %107 = vmatpush1.bf16.xpose.msra.mxu0 %v83
  %108 = vmatprep.subr.bf16.mxu0 0
  %109 = vmatpush1.bf16.xpose.msra.mxu0 0
  %110 = vmatprep.subr.bf16.mxu0 0
  %111 = vmatpush1.bf16.xpose.msra.mxu0 0
  %112 = vmatprep.subr.bf16.mxu0 0
  %113 = vmatpush1.bf16.xpose.msra.mxu0 0
  %114 = vmatprep.subr.bf16.mxu0 0
  %115 = vmatpush1.bf16.xpose.msra.mxu0 0
  %116 = vmatprep.subr.bf16.mxu0 0
  %117 = vmatpush1.bf16.xpose.msra.mxu0 0
  %118 = vmatprep.subr.bf16.mxu0 0
  %119 = vmatpush1.bf16.xpose.msra.mxu0 0
  %120 = vmatprep.subr.bf16.mxu0 0
  %121 = vmatpush1.bf16.xpose.msra.mxu0 0
  %122 = vmatprep.subr.bf16.mxu0 0
  %123 = vmatpush1.bf16.xpose.msra.mxu0 0
  %124 = vmatprep.mubr.bf16.mxu0 0
  %125 = vmatmul.mubr.bf16.gmra.mrb[0].mxu0 %v20
  %v126 = vpop.f32.mrb[0].mxu0
  %v127 = vadd.f32 %v42, %v126
  %v128 = vpop.f32.mrb[0].mxu0
  %v129 = vpop.f32.mrb[0].mxu0
  %v130 = vpop.f32.mrb[0].mxu0
  %131 = vdwg.mxu0
  %v132 = vmul.f32 %v127, 1.442695
  %v133 = vpow.pop %v132
  %v134 = vrot.slane %v133, 4
  %v135 = vadd.f32 %v133, %v134
  %v136 = vrot.slane %v135, 2
  %v137 = vadd.f32 %v135, %v136
  %v138 = vrot.slane %v137, 1
  %v139 = vadd.f32 %v137, %v138
  %140 = vst [vmem:[%s5] sm:$0x1] %v139
  %p141 = scmp.eq.s32.totalorder 0, 0
  // Predicated region
  $region18: #{ntxent_loss.5} parent=0 // pred_check
    %p142 = pneg %p141
  $region19: #{ntxent_loss.5} parent=0 // pred_check_branch
    %144 = sbr.rel (%p142) target = $region21
  $region20: #{ntxent_loss.5} parent=0 // pred_region
    %vm145 = vcmask 7168
    %146 = vst.msk [vmem:[%s4] sm:$0xff] %vm145, 0.0
  $region21: #{ntxent_loss.5} parent=0 // pred_fallthru
    _
  %v147 = vld [vmem:[%s4] sm:$0xff]
  %148 = vadd.xlane.f32.xlu0 %v133
  %v149 = vpop.xlane.xlu0 %148
  %v150 = vadd.f32 %v147, %v149
  %vm151 = vcmask 7168
  %152 = vst.msk [vmem:[%s4] sm:$0xff] %vm151, %v150
  // Predicated region
  $region22: #{ntxent_loss.5} parent=0 // pred_check
    _
  $region23: #{ntxent_loss.5} parent=0 // pred_check_branch
    %154 = sbr.rel (0) target = $region25
  $region24: #{ntxent_loss.5} parent=0 // pred_region
    _
  $region25: #{ntxent_loss.5} parent=0 // pred_fallthru
    _
  // Predicated region
  $region26: #{ntxent_loss.5} parent=0 // pred_check
    _
  $region27: #{ntxent_loss.5} parent=0 // pred_check_branch
    %156 = sbr.rel (0) target = $region29
  $region28: #{ntxent_loss.5} parent=0 // pred_region
    _
  $region29: #{ntxent_loss.5} parent=0 // pred_fallthru
    _
  // Predicated region
  $region30: #{ntxent_loss.5} parent=0 // pred_check
    _
  $region31: #{ntxent_loss.5} parent=0 // pred_check_branch
    %158 = sbr.rel (0) target = $region33
  $region32: #{ntxent_loss.5} parent=0 // pred_region
    _
  $region33: #{ntxent_loss.5} parent=0 // pred_fallthru
    _
  // Predicated region
  $region34: #{ntxent_loss.5} parent=0 // pred_check
    _
  $region35: #{ntxent_loss.5} parent=0 // pred_check_branch
    %160 = sbr.rel (0) target = $region37
  $region36: #{ntxent_loss.5} parent=0 // pred_region
    _
  $region37: #{ntxent_loss.5} parent=0 // pred_fallthru
    _

</llo_original>
